<compile_context>
chip_gen: v6e
topology: v6e:2x2x1
jax: 0.10.0
libtpu: 0.0.40
codegen_flags: <defaults>
</compile_context>

<pallas_src>
import math

import jax
import jax.numpy as jnp
from jax.experimental import pallas as pl
from jax.experimental.pallas import tpu as pltpu


_DROP_P = 0.1
_KEEP_PROB = 1.0 - _DROP_P  # Python float -> becomes a literal, never captured.


def encoder_kernel(self_t_ref, neigh_t_ref, maskn_ref, w_self_ref, w_neigh_ref,
                   rand_ref, out_ref):
    """One batch-tile of the Encoder forward (batch on the 128-lane axis).

    self_t_ref : VMEM (F, Bt)    f32  -- self features, transposed
    neigh_t_ref: VMEM (S, F, Bt) f32  -- gathered neighbor features, transposed
    maskn_ref  : VMEM (S, Bt)    f32  -- mask already divided by clamped count
    w_self_ref : VMEM (E, F)     f32  -- weight[:, :F]   (self half, resident)
    w_neigh_ref: VMEM (E, F)     f32  -- weight[:, F:]   (neighbor half, resident)
    rand_ref   : VMEM (E, Bt)    f32  -- uniform [0,1) dropout draws
    out_ref    : VMEM (E, Bt)    f32  -- dropout(relu(W @ combined.T))
    """
    # Mean aggregation over valid neighbors (MeanAggregator semantics).
    # Mask broadcast is along the sublane (F) axis -> cheap stride-0 expand.
    mean_t = jnp.sum(neigh_t_ref[...] * maskn_ref[...][:, None, :], axis=0)  # (F, Bt)

    # W.mm(cat([self, neigh]).T) == W_self @ self.T + W_neigh @ mean.T
    out = jnp.dot(w_self_ref[...], self_t_ref[...],
                  preferred_element_type=jnp.float32)
    out = out + jnp.dot(w_neigh_ref[...], mean_t,
                        preferred_element_type=jnp.float32)
    out = jnp.maximum(out, 0.0)                                   # ReLU

    # Dropout(p=0.1), train mode, inverted scaling.
    keep = rand_ref[...] < _KEEP_PROB
    out_ref[...] = jnp.where(keep, out * (1.0 / _KEEP_PROB), 0.0)


def encoder_forward(nodes, features, neigh_idx, neigh_mask, weight,
                    dropout_key, *, b_tile=128):
    """Host glue: gathers + layout plumbing outside, hot loop in the kernel."""
    B = nodes.shape[0]
    F = features.shape[1]
    E = weight.shape[0]
    S = neigh_idx.shape[1]

    # Feature lookups (nn.Embedding-style), presented batch-on-lanes.
    # TODO(synk): pull these gathers into the kernel at real GraphSAGE sizes.
    self_t = features[nodes].T                                    # (F, B)
    neigh_t = jnp.transpose(features[neigh_idx], (1, 2, 0))       # (S, F, B)

    # Pre-normalised mask: mask / max(count, 1)  (zero-neighbor nodes -> 0 mean).
    cnt = jnp.maximum(jnp.sum(neigh_mask, axis=1, keepdims=True), 1.0)
    maskn_t = (neigh_mask / cnt).astype(jnp.float32).T            # (S, B)

    # Pre-split weight halves; no transpose needed in the (E, Bt) layout.
    w_self = jnp.asarray(weight[:, :F], dtype=jnp.float32)        # (E, F)
    w_neigh = jnp.asarray(weight[:, F:], dtype=jnp.float32)       # (E, F)

    # Tile the batch; pad instead of collapsing to a single huge block.
    bt = min(b_tile, B)
    b_pad = pl.cdiv(B, bt) * bt
    pad = b_pad - B
    if pad:
        self_t = jnp.pad(self_t, ((0, 0), (0, pad)))
        neigh_t = jnp.pad(neigh_t, ((0, 0), (0, 0), (0, pad)))
        maskn_t = jnp.pad(maskn_t, ((0, 0), (0, pad)))

    # Dropout uniforms, one f32 per output element (host RNG: interpret-safe).
    rand = jax.random.uniform(dropout_key, (E, b_pad), dtype=jnp.float32)

    grid = (b_pad // bt,)

    out = pl.pallas_call(
        encoder_kernel,
        out_shape=jax.ShapeDtypeStruct((E, b_pad), jnp.float32),
        grid_spec=pltpu.PrefetchScalarGridSpec(
            num_scalar_prefetch=0,
            grid=grid,
            in_specs=[
                pl.BlockSpec((F, bt), lambda i: (0, i)),          # self feats^T
                pl.BlockSpec((S, F, bt), lambda i: (0, 0, i)),    # neigh feats^T
                pl.BlockSpec((S, bt), lambda i: (0, i)),          # norm mask^T
                pl.BlockSpec((E, F), lambda i: (0, 0)),           # W_self (resident)
                pl.BlockSpec((E, F), lambda i: (0, 0)),           # W_neigh (resident)
                pl.BlockSpec((E, bt), lambda i: (0, i)),          # dropout uniforms
            ],
            out_specs=pl.BlockSpec((E, bt), lambda i: (0, i)),
        ),
        compiler_params=pltpu.CompilerParams(
            dimension_semantics=("parallel",)),
    )(self_t, neigh_t, maskn_t, w_self, w_neigh, rand)

    # Already in PyTorch's `weight.mm(combined.t())` layout: (embed_dim, B).
    return out[:, :B]


if __name__ == "__main__":
    # Small, deterministic synthetic setup consistent with Encoder.__init__.
    num_nodes, feat_dim, embed_dim = 256, 32, 32
    batch, num_sample = 256, 10                 # grid of 2 tiles (b_tile=128)

    key = jax.random.PRNGKey(0)
    kf, kw, ka, kc, kd = jax.random.split(key, 5)

    # "features" embedding table (nn.Embedding-style lookup in torch).
    features = jax.random.normal(kf, (num_nodes, feat_dim), dtype=jnp.float32)

    # Encoder.weight, xavier_uniform_: U(-b, b), b = sqrt(6/(fan_in+fan_out)).
    fan_in, fan_out = 2 * feat_dim, embed_dim
    bound = math.sqrt(6.0 / (fan_in + fan_out))
    weight = jax.random.uniform(kw, (embed_dim, 2 * feat_dim),
                                dtype=jnp.float32, minval=-bound, maxval=bound)

    # Batch of nodes + deterministic "sampled adjacency" (stand-in for the
    # adj_lists dict + random.sample): indices (B, S) and validity mask.
    nodes = jnp.arange(batch, dtype=jnp.int32) % num_nodes
    neigh_idx = jax.random.randint(ka, (batch, num_sample), 0, num_nodes,
                                   dtype=jnp.int32)
    counts = jax.random.randint(kc, (batch,), 3, num_sample + 1,
                                dtype=jnp.int32)
    neigh_mask = (jnp.arange(num_sample, dtype=jnp.int32)[None, :]
                  < counts[:, None]).astype(jnp.float32)

    out = encoder_forward(nodes, features, neigh_idx, neigh_mask, weight, kd,
                          b_tile=128)
    out = jax.block_until_ready(out)

    # Pure-JAX reference (same dropout uniforms -> comparable elementwise).
    self_f = features[nodes]
    neigh_f = features[neigh_idx]
    cnt = jnp.maximum(jnp.sum(neigh_mask, axis=1, keepdims=True), 1.0)
    mean_f = jnp.sum(neigh_f * neigh_mask[:, :, None], axis=1) / cnt
    combined = jnp.concatenate([self_f, mean_f], axis=1)           # (B, 2F)
    pre = jnp.maximum(weight @ combined.T, 0.0)                    # (E, B)
    rand_ref = jax.random.uniform(kd, (embed_dim, batch), dtype=jnp.float32)
    ref = jnp.where(rand_ref < _KEEP_PROB, pre / _KEEP_PROB, 0.0)

    assert out.shape == (embed_dim, batch), out.shape
    assert out.dtype == jnp.float32
    assert bool(jnp.all(jnp.isfinite(out)))
    assert bool(jnp.all(out >= 0.0))  # ReLU (dropout zeros stay >= 0)
    assert bool(jnp.allclose(out, ref, rtol=1e-4, atol=1e-4)), (
        float(jnp.max(jnp.abs(out - ref))))

    print("KERNEL_OK")
</pallas_src>

<mosaic_0001>
module attributes {stable_mosaic.version = 11 : i64} {
  func.func @encoder_kernel(%arg0: i32, %arg1: memref<32x128xf32, #tpu.memory_space<vmem>>, %arg2: memref<10x32x128xf32, #tpu.memory_space<vmem>>, %arg3: memref<10x128xf32, #tpu.memory_space<vmem>>, %arg4: memref<32x32xf32, #tpu.memory_space<vmem>>, %arg5: memref<32x32xf32, #tpu.memory_space<vmem>>, %arg6: memref<32x128xf32, #tpu.memory_space<vmem>>, %arg7: memref<32x128xf32, #tpu.memory_space<vmem>>) attributes {dimension_semantics = [#tpu.dimension_semantics<parallel>], iteration_bounds = array<i64: 2>, scalar_prefetch = 0 : i64, scratch_operands = 0 : i64, tpu.core_type = #tpu.core_type<tc>, window_params = [{transform_indices = @transform_0, window_bounds = array<i64: 32, 128>}, {transform_indices = @transform_1, window_bounds = array<i64: 10, 32, 128>}, {transform_indices = @transform_2, window_bounds = array<i64: 10, 128>}, {pipeline_mode = #tpu.pipeline_mode<synchronous>, transform_indices = @transform_3, window_bounds = array<i64: 32, 32>}, {pipeline_mode = #tpu.pipeline_mode<synchronous>, transform_indices = @transform_4, window_bounds = array<i64: 32, 32>}, {transform_indices = @transform_5, window_bounds = array<i64: 32, 128>}, {transform_indices = @transform_6, window_bounds = array<i64: 32, 128>}]} {
    %c0 = arith.constant 0 : index
    %c0_0 = arith.constant 0 : index
    %c0_1 = arith.constant 0 : index
    %0 = vector.load %arg2[%c0, %c0_0, %c0_1] : memref<10x32x128xf32, #tpu.memory_space<vmem>>, vector<10x32x128xf32>
    %c0_2 = arith.constant 0 : index
    %c0_3 = arith.constant 0 : index
    %1 = vector.load %arg3[%c0_2, %c0_3] : memref<10x128xf32, #tpu.memory_space<vmem>>, vector<10x128xf32>
    %2 = vector.shape_cast %1 : vector<10x128xf32> to vector<10x1x128xf32>
    %3 = vector.broadcast %2 : vector<10x1x128xf32> to vector<10x32x128xf32>
    %4 = arith.mulf %0, %3 : vector<10x32x128xf32>
    %cst = arith.constant dense<0.000000e+00> : vector<32x128xf32>
    %5 = vector.multi_reduction <add>, %4, %cst [0] : vector<10x32x128xf32> to vector<32x128xf32>
    %c0_4 = arith.constant 0 : index
    %c0_5 = arith.constant 0 : index
    %6 = vector.load %arg4[%c0_4, %c0_5] : memref<32x32xf32, #tpu.memory_space<vmem>>, vector<32x32xf32>
    %c0_6 = arith.constant 0 : index
    %c0_7 = arith.constant 0 : index
    %7 = vector.load %arg1[%c0_6, %c0_7] : memref<32x128xf32, #tpu.memory_space<vmem>>, vector<32x128xf32>
    %cst_8 = arith.constant dense<0.000000e+00> : vector<32x128xf32>
    %8 = tpu.matmul %6, %7, %cst_8 {dimension_numbers = #tpu.dot_dimension_numbers<[1], [0], [0], [1], [0, 0, 1, 1], [], []>} : vector<32x32xf32>, vector<32x128xf32>, vector<32x128xf32> -> vector<32x128xf32>
    %c0_9 = arith.constant 0 : index
    %c0_10 = arith.constant 0 : index
    %9 = vector.load %arg5[%c0_9, %c0_10] : memref<32x32xf32, #tpu.memory_space<vmem>>, vector<32x32xf32>
    %cst_11 = arith.constant dense<0.000000e+00> : vector<32x128xf32>
    %10 = tpu.matmul %9, %5, %cst_11 {dimension_numbers = #tpu.dot_dimension_numbers<[1], [0], [0], [1], [0, 0, 1, 1], [], []>} : vector<32x32xf32>, vector<32x128xf32>, vector<32x128xf32> -> vector<32x128xf32>
    %11 = arith.addf %8, %10 : vector<32x128xf32>
    %cst_12 = arith.constant 0.000000e+00 : f32
    %12 = vector.broadcast %cst_12 : f32 to vector<32x128xf32>
    %13 = arith.maximumf %11, %12 : vector<32x128xf32>
    %c0_13 = arith.constant 0 : index
    %c0_14 = arith.constant 0 : index
    %14 = vector.load %arg6[%c0_13, %c0_14] : memref<32x128xf32, #tpu.memory_space<vmem>>, vector<32x128xf32>
    %cst_15 = arith.constant 0.899999976 : f32
    %15 = vector.broadcast %cst_15 : f32 to vector<32x128xf32>
    %16 = arith.cmpf olt, %14, %15 : vector<32x128xf32>
    %cst_16 = arith.constant 1.11111116 : f32
    %17 = vector.broadcast %cst_16 : f32 to vector<32x128xf32>
    %18 = arith.mulf %13, %17 : vector<32x128xf32>
    %cst_17 = arith.constant 0.000000e+00 : f32
    %19 = vector.broadcast %cst_17 : f32 to vector<32x128xf32>
    %20 = arith.select %16, %18, %19 : vector<32x128xi1>, vector<32x128xf32>
    %c0_18 = arith.constant 0 : index
    %c0_19 = arith.constant 0 : index
    %21 = vector.load %arg7[%c0_18, %c0_19] : memref<32x128xf32, #tpu.memory_space<vmem>>, vector<32x128xf32>
    tpu.vector_store %arg7[%c0_18, %c0_19], %20 {strides = array<i32>} : memref<32x128xf32, #tpu.memory_space<vmem>>, vector<32x128xf32>,
    return
  }
  func.func @transform_0(%arg0: i32) -> (i32, i32) {
    %c0_i32 = arith.constant 0 : i32
    %c0_i32_0 = arith.constant 0 : i32
    return %c0_i32, %arg0 : i32, i32
  }
  func.func @transform_1(%arg0: i32) -> (i32, i32, i32) {
    %c0_i32 = arith.constant 0 : i32
    %c0_i32_0 = arith.constant 0 : i32
    %c0_i32_1 = arith.constant 0 : i32
    return %c0_i32, %c0_i32_0, %arg0 : i32, i32, i32
  }
  func.func @transform_2(%arg0: i32) -> (i32, i32) {
    %c0_i32 = arith.constant 0 : i32
    %c0_i32_0 = arith.constant 0 : i32
    return %c0_i32, %arg0 : i32, i32
  }
  func.func @transform_3(%arg0: i32) -> (i32, i32) {
    %c0_i32 = arith.constant 0 : i32
    %c0_i32_0 = arith.constant 0 : i32
    %c0_i32_1 = arith.constant 0 : i32
    return %c0_i32, %c0_i32_0 : i32, i32
  }
  func.func @transform_4(%arg0: i32) -> (i32, i32) {
    %c0_i32 = arith.constant 0 : i32
    %c0_i32_0 = arith.constant 0 : i32
    %c0_i32_1 = arith.constant 0 : i32
    return %c0_i32, %c0_i32_0 : i32, i32
  }
  func.func @transform_5(%arg0: i32) -> (i32, i32) {
    %c0_i32 = arith.constant 0 : i32
    %c0_i32_0 = arith.constant 0 : i32
    return %c0_i32, %arg0 : i32, i32
  }
  func.func @transform_6(%arg0: i32) -> (i32, i32) {
    %c0_i32 = arith.constant 0 : i32
    %c0_i32_0 = arith.constant 0 : i32
    return %c0_i32, %arg0 : i32, i32
  }
}

</mosaic_0001>

<llo_original>
// kernel: tpu_custom_call.1
$region0: #{tpu_custom_call.1}
  #allocation0 [shape = 'u32[]', space=smem, size = 0x4, offset = 0x4, fixed_abs, tag = 'smem constant byte address 0x4 - core index']
  #allocation1 [shape = 'u32[144,128]{1,0:T(1,128)}', space=vmem, size = 0x12000, scoped, tag = 'internal scratch']
  %s0 = inlined_call_operand.hbm [shape: f32[32,256], index: 0, kind: input, shape index: {}]
  %s1 = inlined_call_operand.hbm [shape: f32[10,32,256], index: 1, kind: input, shape index: {}]
  %s2 = inlined_call_operand.hbm [shape: f32[10,256], index: 2, kind: input, shape index: {}]
  %s3 = inlined_call_operand.hbm [shape: f32[32,32], index: 3, kind: input, shape index: {}]
  %s4 = inlined_call_operand.hbm [shape: f32[32,32], index: 4, kind: input, shape index: {}]
  %s5 = inlined_call_operand.hbm [shape: f32[32,256], index: 5, kind: input, shape index: {}]
  %s6 = inlined_call_operand.hbm [shape: f32[32,256], index: 6, kind: output, shape index: {}]
  %s7 = sld [smem:[#allocation0]]
  $region81: #{tpu_custom_call.1} parent=0
    _
  %s9 = ssub.s32 1, %s7
  %s10 = scalar_select 0, %s9, %s7
  $region1: #{tpu_custom_call.1} parent=0
    #allocation2 [shape = 'u8[32768]{0}', space=vmem, size = 0x8000, scoped, tag = 'input window, operand 0']
    #allocation3 [shape = 's32[2]{0}', space=sflag, size = 0x8, scoped, tag = 'scoped memory for tpu_custom_call.1']
    #allocation4 [shape = 's32[2]{0}', space=sflag, size = 0x8, scoped, tag = 'scoped memory for tpu_custom_call.1']
    #allocation5 [shape = 'u8[327680]{0}', space=vmem, size = 0x50000, scoped, tag = 'input window, operand 1']
    #allocation6 [shape = 's32[2]{0}', space=sflag, size = 0x8, scoped, tag = 'scoped memory for tpu_custom_call.1']
    #allocation7 [shape = 'u8[16384]{0}', space=vmem, size = 0x4000, scoped, tag = 'input window, operand 2']
    #allocation8 [shape = 'u8[16384]{0}', space=vmem, size = 0x4000, scoped, tag = 'input window, operand 3, single buffered']
    #allocation9 [shape = 's32[1]{0}', space=sflag, size = 0x4, scoped, tag = 'scoped memory for tpu_custom_call.1']
    #allocation10 [shape = 'u8[16384]{0}', space=vmem, size = 0x4000, scoped, tag = 'input window, operand 4, single buffered']
    #allocation11 [shape = 'u8[32768]{0}', space=vmem, size = 0x8000, scoped, tag = 'input window, operand 5']
    #allocation12 [shape = 's32[2]{0}', space=sflag, size = 0x8, scoped, tag = 'scoped memory for tpu_custom_call.1']
    #allocation13 [shape = 'u8[32768]{0}', space=vmem, size = 0x8000, scoped, tag = 'output window, operand 0']
    %11 = vsyncpa [#allocation3], 0
    %s12 = scalar_lea.sflag [#allocation3], 1
    %13 = vsyncpa %s12, 0
    %14 = vsyncpa [#allocation6], 0
    %s15 = scalar_lea.sflag [#allocation6], 1
    %16 = vsyncpa %s15, 0
    %17 = vsyncpa [#allocation9], 0
    %18 = vsyncpa [#allocation12], 0
    %s19 = scalar_lea.sflag [#allocation12], 1
    %20 = vsyncpa %s19, 0
    %21 = vsyncpa [#allocation4], 0
    %s22 = scalar_lea.sflag [#allocation4], 1
    %23 = vsyncpa %s22, 0
    loop: start=0, step=1, limit=4
    $region2: #{tpu_custom_call.1} parent=1 // loop_pre_header
      _
    $region3: #{tpu_custom_call.1} parent=1 // loop_header
      %s25 = sphi 0, %s29
      %p26 = scmp.ge.s32.totalorder %s25, 4
      %s35 = sphi 0, %s37
      %s38 = sphi 0, %s35
      %s39 = sphi 0, %s38
      %s55 = sphi 0, %s39
      %s61 = sphi 0, %s63
      %s64 = sphi 0, %s61
      %s65 = sphi 0, %s64
      %s81 = sphi 0, %s65
      %s87 = sphi 0, %s89
      %s90 = sphi 0, %s87
      %s91 = sphi 0, %s90
      %s107 = sphi 0, %s91
      %s111 = sphi 0, %s111
      %s113 = sphi 0, %s111
      %s114 = sphi 0, %s113
      %s128 = sphi 0, %s114
      %s132 = sphi 0, %s132
      %s134 = sphi 0, %s132
      %s135 = sphi 0, %s134
      %s149 = sphi 0, %s135
      %s155 = sphi 0, %s157
      %s158 = sphi 0, %s155
      %s159 = sphi 0, %s158
      %s175 = sphi 0, %s159
      %s181 = sphi 0, %s183
      %s184 = sphi 0, %s181
      %s185 = sphi 0, %s184
      %s201 = sphi 0, %s185
    $region4: #{tpu_custom_call.1} parent=1 // loop_header_branch
      %28 = sbr.rel (%p26) target = $region8
    $region5: #{tpu_custom_call.1} parent=1 // loop_body
      %s30 = ssub.s32 %s25, 1
      %s31 = ssub.s32 %s25, 2
      %s32 = sadd.s32 %s25, 1
      %s33 = ssub.s32 %s25, %s32
      %p34 = scmp.eq.s32.totalorder %s33, 0
      %s36 = sadd.s32 %s35, 1
      %s37 = scalar_select %p34, %s35, %s36
      %p40 = pneg %p34
      %p41 = scmp.eq.s32.totalorder %s25, 1
      %p42 = por %p40, %p41
      %p43 = scmp.ne.s32.totalorder %s35, %s38
      %p44 = scmp.eq.s32.totalorder %s25, 0
      %p45 = por %p43, %p44
      %p46 = scmp.ne.s32.totalorder %s35, %s38
      %p47 = scmp.eq.s32.totalorder %s30, 1
      %p48 = por %p46, %p47
      %p49 = scmp.ne.s32.totalorder %s38, %s39
      %p50 = scmp.eq.s32.totalorder %s30, 0
      %p51 = por %p49, %p50
      %p52 = scmp.ne.s32.totalorder %s38, %s39
      %p53 = scmp.eq.s32.totalorder %s31, 1
      %p54 = por %p52, %p53
      %p56 = scmp.ne.s32.totalorder %s39, %s55
      %p57 = scmp.eq.s32.totalorder %s31, 0
      %p58 = por %p56, %p57
      %s59 = ssub.s32 %s25, %s32
      %p60 = scmp.eq.s32.totalorder %s59, 0
      %s62 = sadd.s32 %s61, 1
      %s63 = scalar_select %p60, %s61, %s62
      %p66 = pneg %p60
      %p67 = scmp.eq.s32.totalorder %s25, 1
      %p68 = por %p66, %p67
      %p69 = scmp.ne.s32.totalorder %s61, %s64
      %p70 = scmp.eq.s32.totalorder %s25, 0
      %p71 = por %p69, %p70
      %p72 = scmp.ne.s32.totalorder %s61, %s64
      %p73 = scmp.eq.s32.totalorder %s30, 1
      %p74 = por %p72, %p73
      %p75 = scmp.ne.s32.totalorder %s64, %s65
      %p76 = scmp.eq.s32.totalorder %s30, 0
      %p77 = por %p75, %p76
      %p78 = scmp.ne.s32.totalorder %s64, %s65
      %p79 = scmp.eq.s32.totalorder %s31, 1
      %p80 = por %p78, %p79
      %p82 = scmp.ne.s32.totalorder %s65, %s81
      %p83 = scmp.eq.s32.totalorder %s31, 0
      %p84 = por %p82, %p83
      %s85 = ssub.s32 %s25, %s32
      %p86 = scmp.eq.s32.totalorder %s85, 0
      %s88 = sadd.s32 %s87, 1
      %s89 = scalar_select %p86, %s87, %s88
      %p92 = pneg %p86
      %p93 = scmp.eq.s32.totalorder %s25, 1
      %p94 = por %p92, %p93
      %p95 = scmp.ne.s32.totalorder %s87, %s90
      %p96 = scmp.eq.s32.totalorder %s25, 0
      %p97 = por %p95, %p96
      %p98 = scmp.ne.s32.totalorder %s87, %s90
      %p99 = scmp.eq.s32.totalorder %s30, 1
      %p100 = por %p98, %p99
      %p101 = scmp.ne.s32.totalorder %s90, %s91
      %p102 = scmp.eq.s32.totalorder %s30, 0
      %p103 = por %p101, %p102
      %p104 = scmp.ne.s32.totalorder %s90, %s91
      %p105 = scmp.eq.s32.totalorder %s31, 1
      %p106 = por %p104, %p105
      %p108 = scmp.ne.s32.totalorder %s91, %s107
      %p109 = scmp.eq.s32.totalorder %s31, 0
      %p110 = por %p108, %p109
      %s112 = sadd.s32 %s111, 1
      %p115 = scmp.eq.s32.totalorder %s25, 1
      %p116 = scmp.ne.s32.totalorder %s111, %s113
      %p117 = scmp.eq.s32.totalorder %s25, 0
      %p118 = por %p116, %p117
      %p119 = scmp.ne.s32.totalorder %s111, %s113
      %p120 = scmp.eq.s32.totalorder %s30, 1
      %p121 = por %p119, %p120
      %p122 = scmp.ne.s32.totalorder %s113, %s114
      %p123 = scmp.eq.s32.totalorder %s30, 0
      %p124 = por %p122, %p123
      %p125 = scmp.ne.s32.totalorder %s113, %s114
      %p126 = scmp.eq.s32.totalorder %s31, 1
      %p127 = por %p125, %p126
      %p129 = scmp.ne.s32.totalorder %s114, %s128
      %p130 = scmp.eq.s32.totalorder %s31, 0
      %p131 = por %p129, %p130
      %s133 = sadd.s32 %s132, 1
      %p136 = scmp.eq.s32.totalorder %s25, 1
      %p137 = scmp.ne.s32.totalorder %s132, %s134
      %p138 = scmp.eq.s32.totalorder %s25, 0
      %p139 = por %p137, %p138
      %p140 = scmp.ne.s32.totalorder %s132, %s134
      %p141 = scmp.eq.s32.totalorder %s30, 1
      %p142 = por %p140, %p141
      %p143 = scmp.ne.s32.totalorder %s134, %s135
      %p144 = scmp.eq.s32.totalorder %s30, 0
      %p145 = por %p143, %p144
      %p146 = scmp.ne.s32.totalorder %s134, %s135
      %p147 = scmp.eq.s32.totalorder %s31, 1
      %p148 = por %p146, %p147
      %p150 = scmp.ne.s32.totalorder %s135, %s149
      %p151 = scmp.eq.s32.totalorder %s31, 0
      %p152 = por %p150, %p151
      %s153 = ssub.s32 %s25, %s32
      %p154 = scmp.eq.s32.totalorder %s153, 0
      %s156 = sadd.s32 %s155, 1
      %s157 = scalar_select %p154, %s155, %s156
      %p160 = pneg %p154
      %p161 = scmp.eq.s32.totalorder %s25, 1
      %p162 = por %p160, %p161
      %p163 = scmp.ne.s32.totalorder %s155, %s158
      %p164 = scmp.eq.s32.totalorder %s25, 0
      %p165 = por %p163, %p164
      %p166 = scmp.ne.s32.totalorder %s155, %s158
      %p167 = scmp.eq.s32.totalorder %s30, 1
      %p168 = por %p166, %p167
      %p169 = scmp.ne.s32.totalorder %s158, %s159
      %p170 = scmp.eq.s32.totalorder %s30, 0
      %p171 = por %p169, %p170
      %p172 = scmp.ne.s32.totalorder %s158, %s159
      %p173 = scmp.eq.s32.totalorder %s31, 1
      %p174 = por %p172, %p173
      %p176 = scmp.ne.s32.totalorder %s159, %s175
      %p177 = scmp.eq.s32.totalorder %s31, 0
      %p178 = por %p176, %p177
      %s179 = ssub.s32 %s25, %s32
      %p180 = scmp.eq.s32.totalorder %s179, 0
      %s182 = sadd.s32 %s181, 1
      %s183 = scalar_select %p180, %s181, %s182
      %p186 = pneg %p180
      %p187 = scmp.eq.s32.totalorder %s25, 1
      %p188 = por %p186, %p187
      %p189 = scmp.ne.s32.totalorder %s181, %s184
      %p190 = scmp.eq.s32.totalorder %s25, 0
      %p191 = por %p189, %p190
      %p192 = scmp.ne.s32.totalorder %s181, %s184
      %p193 = scmp.eq.s32.totalorder %s30, 1
      %p194 = por %p192, %p193
      %p195 = scmp.ne.s32.totalorder %s184, %s185
      %p196 = scmp.eq.s32.totalorder %s30, 0
      %p197 = por %p195, %p196
      %p198 = scmp.ne.s32.totalorder %s184, %s185
      %p199 = scmp.eq.s32.totalorder %s31, 1
      %p200 = por %p198, %p199
      %p202 = scmp.ne.s32.totalorder %s185, %s201
      %p203 = scmp.eq.s32.totalorder %s31, 0
      %p204 = por %p202, %p203
      %p205 = scmp.le.s32.totalorder 1, %s25
      %p206 = scmp.lt.s32.totalorder %s25, 3
      %p207 = pnand %p205, %p206
      %p208 = pneg %p207
      // Predicated region
      $region9: #{tpu_custom_call.1} parent=5 // pred_check
        _
      $region10: #{tpu_custom_call.1} parent=5 // pred_check_branch
        %210 = sbr.rel (%p207) target = $region12
      $region11: #{tpu_custom_call.1} parent=5 // pred_region
        %s211 = ssub.s32 %s25, 1
        // Predicated region
        $region13: #{tpu_custom_call.1} parent=11 // pred_check
          %p212 = pneg %p124
        $region14: #{tpu_custom_call.1} parent=11 // pred_check_branch
          %214 = sbr.rel (%p212) target = $region16
        $region15: #{tpu_custom_call.1} parent=11 // pred_region
          %s216 = ssub.s32 512, 512
          %217 = vsyncadd [#allocation9], %s216
          %s218 = sshll.u32 [#allocation8], 4
          %s219 = int_to_ptr.vmem [resolvable:$true] %s218
          %224 = dma.hbm_to_vmem [thread:$0]  %s3, 512, %s219, [#allocation9], 128, 128, 8
        $region16: #{tpu_custom_call.1} parent=11 // pred_fallthru
          _
        // Predicated region
        $region17: #{tpu_custom_call.1} parent=11 // pred_check
          %p225 = pneg %p145
        $region18: #{tpu_custom_call.1} parent=11 // pred_check_branch
          %227 = sbr.rel (%p225) target = $region20
        $region19: #{tpu_custom_call.1} parent=11 // pred_region
          %s229 = ssub.s32 512, 512
          %230 = vsyncadd [#allocation9], %s229
          %s231 = sshll.u32 [#allocation10], 4
          %s232 = int_to_ptr.vmem [resolvable:$true] %s231
          %237 = dma.hbm_to_vmem [thread:$0]  %s4, 512, %s232, [#allocation9], 128, 128, 8
        $region20: #{tpu_custom_call.1} parent=11 // pred_fallthru
          _
      $region12: #{tpu_custom_call.1} parent=5 // pred_fallthru
        _
      %p238 = scmp.lt.s32.totalorder %s25, 2
      // Predicated region
      $region21: #{tpu_custom_call.1} parent=5 // pred_check
        %p239 = pneg %p238
      $region22: #{tpu_custom_call.1} parent=5 // pred_check_branch
        %241 = sbr.rel (%p239) target = $region24
      $region23: #{tpu_custom_call.1} parent=5 // pred_region
        // Predicated region
        $region25: #{tpu_custom_call.1} parent=23 // pred_check
          %p242 = pneg %p45
        $region26: #{tpu_custom_call.1} parent=23 // pred_check_branch
          %244 = sbr.rel (%p242) target = $region28
        $region27: #{tpu_custom_call.1} parent=23 // pred_region
          %s245 = sand.u32 %s35, 1
          %s246 = scalar_lea.sflag [#allocation3], %s245
          %s247 = sand.u32 %s35, 1
          %s248 = smul.addr %s247, 32
          %s249 = scalar_lea.vmem [#allocation2], %s248
          %s251 = ssub.s32 512, 512
          %252 = vsyncadd %s246, %s251
          %s253 = smul.addr %s25, 128
          %s254 = scalar_lea.hbm %s0, %s253
          %s255 = sshll.u32 %s249, 4
          %s256 = int_to_ptr.vmem [resolvable:$true] %s255
          %261 = dma.hbm_to_vmem [thread:$0]  %s254, 512, %s256, %s246, 256, 128, 8
        $region28: #{tpu_custom_call.1} parent=23 // pred_fallthru
          _
        // Predicated region
        $region29: #{tpu_custom_call.1} parent=23 // pred_check
          %p262 = pneg %p71
        $region30: #{tpu_custom_call.1} parent=23 // pred_check_branch
          %264 = sbr.rel (%p262) target = $region32
        $region31: #{tpu_custom_call.1} parent=23 // pred_region
          %s265 = sand.u32 %s25, 1
          %s266 = scalar_lea.sflag [#allocation6], %s265
          %s267 = sand.u32 %s61, 1
          %s268 = smul.addr %s267, 320
          %s269 = scalar_lea.vmem [#allocation5], %s268
          %s271 = ssub.s32 5120, 5120
          %272 = vsyncadd %s266, %s271
          %s273 = smul.addr %s25, 128
          %s274 = scalar_lea.hbm %s1, %s273
          %s275 = sshll.u32 %s269, 4
          %s276 = int_to_ptr.vmem [resolvable:$true] %s275
          %281 = dma.hbm_to_vmem [thread:$0]  %s274, 5120, %s276, %s266, 256, 128, 8
        $region32: #{tpu_custom_call.1} parent=23 // pred_fallthru
          _
        // Predicated region
        $region33: #{tpu_custom_call.1} parent=23 // pred_check
          %p282 = pneg %p97
        $region34: #{tpu_custom_call.1} parent=23 // pred_check_branch
          %284 = sbr.rel (%p282) target = $region36
        $region35: #{tpu_custom_call.1} parent=23 // pred_region
          %s285 = sand.u32 %s25, 1
          %s286 = scalar_lea.sflag [#allocation6], %s285
          %s287 = sand.u32 %s87, 1
          %s288 = smul.addr %s287, 16
          %s289 = scalar_lea.vmem [#allocation7], %s288
          %s291 = ssub.s32 256, 256
          %292 = vsyncadd %s286, %s291
          %s293 = smul.addr %s25, 128
          %s294 = scalar_lea.hbm %s2, %s293
          %s295 = sshll.u32 %s289, 4
          %s296 = int_to_ptr.vmem [resolvable:$true] %s295
          %301 = dma.hbm_to_vmem [thread:$0]  %s294, 256, %s296, %s286, 256, 128, 8
        $region36: #{tpu_custom_call.1} parent=23 // pred_fallthru
          _
        // Predicated region
        $region37: #{tpu_custom_call.1} parent=23 // pred_check
          %p302 = pneg %p165
        $region38: #{tpu_custom_call.1} parent=23 // pred_check_branch
          %304 = sbr.rel (%p302) target = $region40
        $region39: #{tpu_custom_call.1} parent=23 // pred_region
          %s305 = sand.u32 %s155, 1
          %s306 = scalar_lea.sflag [#allocation12], %s305
          %s307 = sand.u32 %s155, 1
          %s308 = smul.addr %s307, 32
          %s309 = scalar_lea.vmem [#allocation11], %s308
          %s311 = ssub.s32 512, 512
          %312 = vsyncadd %s306, %s311
          %s313 = smul.addr %s25, 128
          %s314 = scalar_lea.hbm %s5, %s313
          %s315 = sshll.u32 %s309, 4
          %s316 = int_to_ptr.vmem [resolvable:$true] %s315
          %321 = dma.hbm_to_vmem [thread:$0]  %s314, 512, %s316, %s306, 256, 128, 8
        $region40: #{tpu_custom_call.1} parent=23 // pred_fallthru
          _
      $region24: #{tpu_custom_call.1} parent=5 // pred_fallthru
        _
      %p322 = scmp.le.s32.totalorder 1, %s25
      %p323 = scmp.lt.s32.totalorder %s25, 3
      %p324 = pnand %p322, %p323
      %p325 = pneg %p324
      // Predicated region
      $region41: #{tpu_custom_call.1} parent=5 // pred_check
        _
      $region42: #{tpu_custom_call.1} parent=5 // pred_check_branch
        %327 = sbr.rel (%p324) target = $region44
      $region43: #{tpu_custom_call.1} parent=5 // pred_region
        %s328 = ssub.s32 %s25, 1
        %s329 = sand.u32 %s38, 1
        %s330 = scalar_lea.sflag [#allocation3], %s329
        %s331 = sand.u32 %s38, 1
        %s332 = smul.addr %s331, 32
        %s333 = scalar_lea.vmem [#allocation2], %s332
        // Predicated region
        $region45: #{tpu_custom_call.1} parent=43 // pred_check
          %p334 = pneg %p51
        $region46: #{tpu_custom_call.1} parent=43 // pred_check_branch
          %336 = sbr.rel (%p334) target = $region48
        $region47: #{tpu_custom_call.1} parent=43 // pred_region
          %337 = dma.done %s330, 512
        $region48: #{tpu_custom_call.1} parent=43 // pred_fallthru
          _
        %s338 = sand.u32 %s30, 1
        %s339 = scalar_lea.sflag [#allocation6], %s338
        %s340 = sand.u32 %s64, 1
        %s341 = smul.addr %s340, 320
        %s342 = scalar_lea.vmem [#allocation5], %s341
        // Predicated region
        $region49: #{tpu_custom_call.1} parent=43 // pred_check
          %p343 = pneg %p77
        $region50: #{tpu_custom_call.1} parent=43 // pred_check_branch
          %345 = sbr.rel (%p343) target = $region52
        $region51: #{tpu_custom_call.1} parent=43 // pred_region
          %346 = dma.done %s339, 5120
        $region52: #{tpu_custom_call.1} parent=43 // pred_fallthru
          _
        %s347 = sand.u32 %s30, 1
        %s348 = scalar_lea.sflag [#allocation6], %s347
        %s349 = sand.u32 %s90, 1
        %s350 = smul.addr %s349, 16
        %s351 = scalar_lea.vmem [#allocation7], %s350
        // Predicated region
        $region53: #{tpu_custom_call.1} parent=43 // pred_check
          %p352 = pneg %p103
        $region54: #{tpu_custom_call.1} parent=43 // pred_check_branch
          %354 = sbr.rel (%p352) target = $region56
        $region55: #{tpu_custom_call.1} parent=43 // pred_region
          %355 = dma.done %s348, 256
        $region56: #{tpu_custom_call.1} parent=43 // pred_fallthru
          _
        // Predicated region
        $region57: #{tpu_custom_call.1} parent=43 // pred_check
          %p356 = pneg %p124
        $region58: #{tpu_custom_call.1} parent=43 // pred_check_branch
          %358 = sbr.rel (%p356) target = $region60
        $region59: #{tpu_custom_call.1} parent=43 // pred_region
          %359 = dma.done [#allocation9], 512
        $region60: #{tpu_custom_call.1} parent=43 // pred_fallthru
          _
        // Predicated region
        $region61: #{tpu_custom_call.1} parent=43 // pred_check
          %p360 = pneg %p145
        $region62: #{tpu_custom_call.1} parent=43 // pred_check_branch
          %362 = sbr.rel (%p360) target = $region64
        $region63: #{tpu_custom_call.1} parent=43 // pred_region
          %363 = dma.done [#allocation9], 512
        $region64: #{tpu_custom_call.1} parent=43 // pred_fallthru
          _
        %s364 = sand.u32 %s158, 1
        %s365 = scalar_lea.sflag [#allocation12], %s364
        %s366 = sand.u32 %s158, 1
        %s367 = smul.addr %s366, 32
        %s368 = scalar_lea.vmem [#allocation11], %s367
        // Predicated region
        $region65: #{tpu_custom_call.1} parent=43 // pred_check
          %p369 = pneg %p171
        $region66: #{tpu_custom_call.1} parent=43 // pred_check_branch
          %371 = sbr.rel (%p369) target = $region68
        $region67: #{tpu_custom_call.1} parent=43 // pred_region
          %372 = dma.done %s365, 512
        $region68: #{tpu_custom_call.1} parent=43 // pred_fallthru
          _
        %s373 = sand.u32 %s38, 1
        %s374 = scalar_lea.sflag [#allocation3], %s373
        %s375 = sand.u32 %s38, 1
        %s376 = smul.addr %s375, 32
        %s377 = scalar_lea.vmem [#allocation2], %s376
        %p378 = pneg %p51
        %p379 = pneg %p48
        %s380 = sand.u32 %s30, 1
        %s381 = scalar_lea.sflag [#allocation6], %s380
        %s382 = sand.u32 %s64, 1
        %s383 = smul.addr %s382, 320
        %s384 = scalar_lea.vmem [#allocation5], %s383
        %p385 = pneg %p77
        %p386 = pneg %p74
        %s387 = sand.u32 %s30, 1
        %s388 = scalar_lea.sflag [#allocation6], %s387
        %s389 = sand.u32 %s90, 1
        %s390 = smul.addr %s389, 16
        %s391 = scalar_lea.vmem [#allocation7], %s390
        %p392 = pneg %p103
        %p393 = pneg %p100
        %p394 = pneg %p124
        %p395 = pneg %p121
        %p396 = pneg %p145
        %p397 = pneg %p142
        %s398 = sand.u32 %s158, 1
        %s399 = scalar_lea.sflag [#allocation12], %s398
        %s400 = sand.u32 %s158, 1
        %s401 = smul.addr %s400, 32
        %s402 = scalar_lea.vmem [#allocation11], %s401
        %p403 = pneg %p171
        %p404 = pneg %p168
        %p405 = pneg %p197
        %p406 = pneg %p194
        %s407 = sand.u32 %s184, 1
        %s408 = scalar_lea.sflag [#allocation4], %s407
        %s409 = sand.u32 %s184, 1
        %s410 = smul.addr %s409, 32
        %s411 = scalar_lea.vmem [#allocation13], %s410
        %v412 = vld [vmem:[%s342] sm:$0xff]
        %v413 = vld [vmem:[%s342 + $0x8] sm:$0xff]
        %v414 = vld [vmem:[%s342 + $0x10] sm:$0xff]
        %v415 = vld [vmem:[%s342 + $0x18] sm:$0xff]
        %v416 = vld [vmem:[%s342 + $0x20] sm:$0xff]
        %v417 = vld [vmem:[%s342 + $0x28] sm:$0xff]
        %v418 = vld [vmem:[%s342 + $0x30] sm:$0xff]
        %v419 = vld [vmem:[%s342 + $0x38] sm:$0xff]
        %v420 = vld [vmem:[%s342 + $0x40] sm:$0xff]
        %v421 = vld [vmem:[%s342 + $0x48] sm:$0xff]
        %v422 = vld [vmem:[%s342 + $0x50] sm:$0xff]
        %v423 = vld [vmem:[%s342 + $0x58] sm:$0xff]
        %v424 = vld [vmem:[%s342 + $0x60] sm:$0xff]
        %v425 = vld [vmem:[%s342 + $0x68] sm:$0xff]
        %v426 = vld [vmem:[%s342 + $0x70] sm:$0xff]
        %v427 = vld [vmem:[%s342 + $0x78] sm:$0xff]
        %v428 = vld [vmem:[%s342 + $0x80] sm:$0xff]
        %v429 = vld [vmem:[%s342 + $0x88] sm:$0xff]
        %v430 = vld [vmem:[%s342 + $0x90] sm:$0xff]
        %v431 = vld [vmem:[%s342 + $0x98] sm:$0xff]
        %v432 = vld [vmem:[%s342 + $0xa0] sm:$0xff]
        %v433 = vld [vmem:[%s342 + $0xa8] sm:$0xff]
        %v434 = vld [vmem:[%s342 + $0xb0] sm:$0xff]
        %v435 = vld [vmem:[%s342 + $0xb8] sm:$0xff]
        %v436 = vld [vmem:[%s342 + $0xc0] sm:$0xff]
        %v437 = vld [vmem:[%s342 + $0xc8] sm:$0xff]
        %v438 = vld [vmem:[%s342 + $0xd0] sm:$0xff]
        %v439 = vld [vmem:[%s342 + $0xd8] sm:$0xff]
        %v440 = vld [vmem:[%s342 + $0xe0] sm:$0xff]
        %v441 = vld [vmem:[%s342 + $0xe8] sm:$0xff]
        %v442 = vld [vmem:[%s342 + $0xf0] sm:$0xff]
        %v443 = vld [vmem:[%s342 + $0xf8] sm:$0xff]
        %v444 = vld [vmem:[%s342 + $0x100] sm:$0xff]
        %v445 = vld [vmem:[%s342 + $0x108] sm:$0xff]
        %v446 = vld [vmem:[%s342 + $0x110] sm:$0xff]
        %v447 = vld [vmem:[%s342 + $0x118] sm:$0xff]
        %v448 = vld [vmem:[%s342 + $0x120] sm:$0xff]
        %v449 = vld [vmem:[%s342 + $0x128] sm:$0xff]
        %v450 = vld [vmem:[%s342 + $0x130] sm:$0xff]
        %v451 = vld [vmem:[%s342 + $0x138] sm:$0xff]
        %v452 = vld [vmem:[%s351] sm:$0xff]
        %v453 = vld [vmem:[%s351 + $0x8] sm:$0x3]
        %v456 = vcombine.high %v452, %v452
        %v458 = vunpack.c.l.s4 1966171168
        %v459 = vunpack.c.0.s8 %v458
        %v460 = vlaneseq
        %v461 = vshrl.u32 %v460, 7
        %v462 = vsub.s32 %v459, %v461
        %v463 = vrot.slane %v452, %v462
        %v465 = vunpack.c.l.s4 1966171168
        %v466 = vunpack.c.0.s8 %v465
        %v467 = vlaneseq
        %v468 = vshrl.u32 %v467, 7
        %v469 = vsub.s32 %v466, %v468
        %v470 = vrot.slane %v456, %v469
        %v471 = vcombine.high %v463, %v463
        %v472 = vcombine.high %v470, %v470
        %v474 = vunpack.c.l.s4 1966171168
        %v475 = vunpack.c.0.s8 %v474
        %v476 = vlaneseq
        %v477 = vshrl.u32 %v476, 7
        %v478 = vsub.s32 %v475, %v477
        %v479 = vrot.slane %v463, %v478
        %v481 = vunpack.c.l.s4 1966171168
        %v482 = vunpack.c.0.s8 %v481
        %v483 = vlaneseq
        %v484 = vshrl.u32 %v483, 7
        %v485 = vsub.s32 %v482, %v484
        %v486 = vrot.slane %v470, %v485
        %v488 = vunpack.c.l.s4 1966171168
        %v489 = vunpack.c.0.s8 %v488
        %v490 = vlaneseq
        %v491 = vshrl.u32 %v490, 7
        %v492 = vsub.s32 %v489, %v491
        %v493 = vrot.slane %v471, %v492
        %v495 = vunpack.c.l.s4 1966171168
        %v496 = vunpack.c.0.s8 %v495
        %v497 = vlaneseq
        %v498 = vshrl.u32 %v497, 7
        %v499 = vsub.s32 %v496, %v498
        %v500 = vrot.slane %v472, %v499
        %v501 = vcombine.high %v479, %v479
        %v502 = vcombine.high %v486, %v486
        %v503 = vcombine.high %v493, %v493
        %v504 = vcombine.high %v500, %v500
        %v506 = vunpack.c.l.s4 1966171168
        %v507 = vunpack.c.0.s8 %v506
        %v508 = vlaneseq
        %v509 = vshrl.u32 %v508, 7
        %v510 = vsub.s32 %v507, %v509
        %v511 = vrot.slane %v453, %v510
        %v512 = vcombine.high %v511, %v511
        %v514 = vunpack.c.l.s4 1966171168
        %v515 = vunpack.c.0.s8 %v514
        %v516 = vlaneseq
        %v517 = vshrl.u32 %v516, 7
        %v518 = vsub.s32 %v515, %v517
        %v519 = vrot.slane %v511, %v518
        %v521 = vunpack.c.l.s4 1966171168
        %v522 = vunpack.c.0.s8 %v521
        %v523 = vlaneseq
        %v524 = vshrl.u32 %v523, 7
        %v525 = vsub.s32 %v522, %v524
        %v526 = vrot.slane %v512, %v525
        %v527 = vlaneseq
        %v528 = vshrl.u32 %v527, 7
        %v529 = vsub.s32 0, %v528
        %v530 = vrot.slane %v479, %v529
        %v531 = vlaneseq
        %v532 = vshrl.u32 %v531, 7
        %v533 = vsub.s32 0, %v532
        %v534 = vrot.slane %v493, %v533
        %v535 = vlaneseq
        %v536 = vshrl.u32 %v535, 7
        %v537 = vsub.s32 0, %v536
        %v538 = vrot.slane %v501, %v537
        %v539 = vlaneseq
        %v540 = vshrl.u32 %v539, 7
        %v541 = vsub.s32 0, %v540
        %v542 = vrot.slane %v503, %v541
        %v543 = vlaneseq
        %v544 = vshrl.u32 %v543, 7
        %v545 = vsub.s32 0, %v544
        %v546 = vrot.slane %v486, %v545
        %v547 = vlaneseq
        %v548 = vshrl.u32 %v547, 7
        %v549 = vsub.s32 0, %v548
        %v550 = vrot.slane %v500, %v549
        %v551 = vlaneseq
        %v552 = vshrl.u32 %v551, 7
        %v553 = vsub.s32 0, %v552
        %v554 = vrot.slane %v502, %v553
        %v555 = vlaneseq
        %v556 = vshrl.u32 %v555, 7
        %v557 = vsub.s32 0, %v556
        %v558 = vrot.slane %v504, %v557
        %v559 = vlaneseq
        %v560 = vshrl.u32 %v559, 7
        %v561 = vsub.s32 0, %v560
        %v562 = vrot.slane %v519, %v561
        %v563 = vlaneseq
        %v564 = vshrl.u32 %v563, 7
        %v565 = vsub.s32 0, %v564
        %v566 = vrot.slane %v526, %v565
        %v577 = vmul.f32 %v412, %v530
        %v578 = vmul.f32 %v413, %v530
        %v579 = vmul.f32 %v414, %v530
        %v580 = vmul.f32 %v415, %v530
        %v581 = vmul.f32 %v416, %v534
        %v582 = vmul.f32 %v417, %v534
        %v583 = vmul.f32 %v418, %v534
        %v584 = vmul.f32 %v419, %v534
        %v585 = vmul.f32 %v420, %v538
        %v586 = vmul.f32 %v421, %v538
        %v587 = vmul.f32 %v422, %v538
        %v588 = vmul.f32 %v423, %v538
        %v589 = vmul.f32 %v424, %v542
        %v590 = vmul.f32 %v425, %v542
        %v591 = vmul.f32 %v426, %v542
        %v592 = vmul.f32 %v427, %v542
        %v593 = vmul.f32 %v428, %v546
        %v594 = vmul.f32 %v429, %v546
        %v595 = vmul.f32 %v430, %v546
        %v596 = vmul.f32 %v431, %v546
        %v597 = vmul.f32 %v432, %v550
        %v598 = vmul.f32 %v433, %v550
        %v599 = vmul.f32 %v434, %v550
        %v600 = vmul.f32 %v435, %v550
        %v601 = vmul.f32 %v436, %v554
        %v602 = vmul.f32 %v437, %v554
        %v603 = vmul.f32 %v438, %v554
        %v604 = vmul.f32 %v439, %v554
        %v605 = vmul.f32 %v440, %v558
        %v606 = vmul.f32 %v441, %v558
        %v607 = vmul.f32 %v442, %v558
        %v608 = vmul.f32 %v443, %v558
        %v609 = vmul.f32 %v444, %v562
        %v610 = vmul.f32 %v445, %v562
        %v611 = vmul.f32 %v446, %v562
        %v612 = vmul.f32 %v447, %v562
        %v613 = vmul.f32 %v448, %v566
        %v614 = vmul.f32 %v449, %v566
        %v615 = vmul.f32 %v450, %v566
        %v616 = vmul.f32 %v451, %v566
        %v617 = vadd.f32 %v577, %v581
        %v618 = vadd.f32 %v617, %v585
        %v619 = vadd.f32 %v618, %v589
        %v620 = vadd.f32 %v619, %v593
        %v621 = vadd.f32 %v620, %v597
        %v622 = vadd.f32 %v621, %v601
        %v623 = vadd.f32 %v622, %v605
        %v624 = vadd.f32 %v623, %v609
        %v625 = vadd.f32 %v624, %v613
        %v626 = vadd.f32 %v578, %v582
        %v627 = vadd.f32 %v626, %v586
        %v628 = vadd.f32 %v627, %v590
        %v629 = vadd.f32 %v628, %v594
        %v630 = vadd.f32 %v629, %v598
        %v631 = vadd.f32 %v630, %v602
        %v632 = vadd.f32 %v631, %v606
        %v633 = vadd.f32 %v632, %v610
        %v634 = vadd.f32 %v633, %v614
        %v635 = vadd.f32 %v579, %v583
        %v636 = vadd.f32 %v635, %v587
        %v637 = vadd.f32 %v636, %v591
        %v638 = vadd.f32 %v637, %v595
        %v639 = vadd.f32 %v638, %v599
        %v640 = vadd.f32 %v639, %v603
        %v641 = vadd.f32 %v640, %v607
        %v642 = vadd.f32 %v641, %v611
        %v643 = vadd.f32 %v642, %v615
        %v644 = vadd.f32 %v580, %v584
        %v645 = vadd.f32 %v644, %v588
        %v646 = vadd.f32 %v645, %v592
        %v647 = vadd.f32 %v646, %v596
        %v648 = vadd.f32 %v647, %v600
        %v649 = vadd.f32 %v648, %v604
        %v650 = vadd.f32 %v649, %v608
        %v651 = vadd.f32 %v650, %v612
        %v652 = vadd.f32 %v651, %v616
        %v653 = vld [vmem:[#allocation8] sm:$0xff]
        %v654 = vld [vmem:[#allocation8 + $0x8] sm:$0xff]
        %v655 = vld [vmem:[#allocation8 + $0x10] sm:$0xff]
        %v656 = vld [vmem:[#allocation8 + $0x18] sm:$0xff]
        %v657 = vld [vmem:[%s333] sm:$0xff]
        %v658 = vld [vmem:[%s333 + $0x8] sm:$0xff]
        %v659 = vld [vmem:[%s333 + $0x10] sm:$0xff]
        %v660 = vld [vmem:[%s333 + $0x18] sm:$0xff]
        %v661 = vld [vmem:[#allocation10] sm:$0xff]
        %v662 = vld [vmem:[#allocation10 + $0x8] sm:$0xff]
        %v663 = vld [vmem:[#allocation10 + $0x10] sm:$0xff]
        %v664 = vld [vmem:[#allocation10 + $0x18] sm:$0xff]
        %vm665 = vcmask 261120
        %v667 = vsel %vm665, %v661, 0
        %v670 = vsel %vm665, %v662, 0
        %v673 = vsel %vm665, %v663, 0
        %v676 = vsel %vm665, %v664, 0
        %678 = vmatprep.subr.mxu0 0.0
        %679 = vmatpush1.msra.mxu0 0.0
        %680 = vmatprep.subr.mxu0 0.0
        %681 = vmatpush1.msra.mxu0 0.0
        %682 = vmatprep.subr.mxu0 0.0
        %683 = vmatpush1.msra.mxu0 0.0
        %684 = vmatprep.subr.mxu0 0.0
        %685 = vmatpush1.msra.mxu0 0.0
        %686 = vmatprep.subr.mxu0 0.0
        %687 = vmatpush1.msra.mxu0 0.0
        %688 = vmatprep.subr.mxu0 0.0
        %689 = vmatpush1.msra.mxu0 0.0
        %690 = vmatprep.subr.mxu0 0.0
        %691 = vmatpush1.msra.mxu0 0.0
        %692 = vmatprep.subr.mxu0 0.0
        %693 = vmatpush1.msra.mxu0 0.0
        %694 = vmatprep.subr.mxu0 0.0
        %695 = vmatpush1.msra.mxu0 0.0
        %696 = vmatprep.subr.mxu0 0.0
        %697 = vmatpush1.msra.mxu0 0.0
        %698 = vmatprep.subr.mxu0 0.0
        %699 = vmatpush1.msra.mxu0 0.0
        %700 = vmatprep.subr.mxu0 0.0
        %701 = vmatpush1.msra.mxu0 0.0
        %702 = vmatprep.subr.mxu0 0.0
        %703 = vmatpush1.msra.mxu0 %v652
        %704 = vmatprep.subr.mxu0 0.0
        %705 = vmatpush1.msra.mxu0 %v643
        %706 = vmatprep.subr.mxu0 0.0
        %707 = vmatpush1.msra.mxu0 %v634
        %708 = vmatprep.subr.mxu0 0.0
        %709 = vmatpush1.msra.mxu0 %v625
        %710 = vmatprep.subr.mxu0 0.0
        %711 = vmatpush2.msra.mxu0 0.0
        %712 = vmatprep.subr.mxu0 0.0
        %713 = vmatpush2.msra.mxu0 0.0
        %714 = vmatprep.subr.mxu0 0.0
        %715 = vmatpush2.msra.mxu0 0.0
        %716 = vmatprep.subr.mxu0 0.0
        %717 = vmatpush2.msra.mxu0 0.0
        %718 = vmatprep.subr.mxu0 0.0
        %719 = vmatpush2.msra.mxu0 0.0
        %720 = vmatprep.subr.mxu0 0.0
        %721 = vmatpush2.msra.mxu0 0.0
        %722 = vmatprep.subr.mxu0 0.0
        %723 = vmatpush2.msra.mxu0 0.0
        %724 = vmatprep.subr.mxu0 0.0
        %725 = vmatpush2.msra.mxu0 0.0
        %726 = vmatprep.subr.mxu0 0.0
        %727 = vmatpush2.msra.mxu0 0.0
        %728 = vmatprep.subr.mxu0 0.0
        %729 = vmatpush2.msra.mxu0 0.0
        %730 = vmatprep.subr.mxu0 0.0
        %731 = vmatpush2.msra.mxu0 0.0
        %732 = vmatprep.subr.mxu0 0.0
        %733 = vmatpush2.msra.mxu0 0.0
        %734 = vmatprep.subr.mxu0 0.0
        %735 = vmatpush2.msra.mxu0 0.0
        %736 = vmatprep.subr.mxu0 0.0
        %737 = vmatpush2.msra.mxu0 0.0
        %738 = vmatprep.subr.mxu0 0.0
        %739 = vmatpush2.msra.mxu0 0.0
        %740 = vmatprep.subr.mxu0 0.0
        %741 = vmatpush2.msra.mxu0 0.0
        %742 = vmatprep.mubr.f32.mxu0 0.0
        %743 = vmatmul.mubr.f32.gmra.mxu0 %v667
        %v744 = vpop.f32.mrf.mxu0
        %v745 = vadd.f32 0.0, %v744
        %v746 = vpop.f32.mrf.mxu0
        %747 = vmatprep.mubr.f32.mxu0 0.0
        %748 = vmatmul.mubr.f32.gmra.mxu0 %v670
        %v749 = vpop.f32.mrf.mxu0
        %v750 = vadd.f32 0.0, %v749
        %v751 = vpop.f32.mrf.mxu0
        %752 = vmatprep.mubr.f32.mxu0 0.0
        %753 = vmatmul.mubr.f32.gmra.mxu0 %v673
        %v754 = vpop.f32.mrf.mxu0
        %v755 = vadd.f32 0.0, %v754
        %v756 = vpop.f32.mrf.mxu0
        %757 = vmatprep.mubr.f32.mxu0 0.0
        %758 = vmatmul.mubr.f32.gmra.mxu0 %v676
        %v759 = vpop.f32.mrf.mxu0
        %v760 = vadd.f32 0.0, %v759
        %v761 = vpop.f32.mrf.mxu0
        %762 = vdwg.mxu0
        %v764 = vsel %vm665, %v653, 0
        %v767 = vsel %vm665, %v654, 0
        %v770 = vsel %vm665, %v655, 0
        %v773 = vsel %vm665, %v656, 0
        %775 = vmatprep.subr.mxu0 0.0
        %776 = vmatpush1.msra.mxu0 0.0
        %777 = vmatprep.subr.mxu0 0.0
        %778 = vmatpush1.msra.mxu0 0.0
        %779 = vmatprep.subr.mxu0 0.0
        %780 = vmatpush1.msra.mxu0 0.0
        %781 = vmatprep.subr.mxu0 0.0
        %782 = vmatpush1.msra.mxu0 0.0
        %783 = vmatprep.subr.mxu0 0.0
        %784 = vmatpush1.msra.mxu0 0.0
        %785 = vmatprep.subr.mxu0 0.0
        %786 = vmatpush1.msra.mxu0 0.0
        %787 = vmatprep.subr.mxu0 0.0
        %788 = vmatpush1.msra.mxu0 0.0
        %789 = vmatprep.subr.mxu0 0.0
        %790 = vmatpush1.msra.mxu0 0.0
        %791 = vmatprep.subr.mxu0 0.0
        %792 = vmatpush1.msra.mxu0 0.0
        %793 = vmatprep.subr.mxu0 0.0
        %794 = vmatpush1.msra.mxu0 0.0
        %795 = vmatprep.subr.mxu0 0.0
        %796 = vmatpush1.msra.mxu0 0.0
        %797 = vmatprep.subr.mxu0 0.0
        %798 = vmatpush1.msra.mxu0 0.0
        %799 = vmatprep.subr.mxu0 0.0
        %800 = vmatpush1.msra.mxu0 %v660
        %801 = vmatprep.subr.mxu0 0.0
        %802 = vmatpush1.msra.mxu0 %v659
        %803 = vmatprep.subr.mxu0 0.0
        %804 = vmatpush1.msra.mxu0 %v658
        %805 = vmatprep.subr.mxu0 0.0
        %806 = vmatpush1.msra.mxu0 %v657
        %807 = vmatprep.subr.mxu0 0.0
        %808 = vmatpush2.msra.mxu0 0.0
        %809 = vmatprep.subr.mxu0 0.0
        %810 = vmatpush2.msra.mxu0 0.0
        %811 = vmatprep.subr.mxu0 0.0
        %812 = vmatpush2.msra.mxu0 0.0
        %813 = vmatprep.subr.mxu0 0.0
        %814 = vmatpush2.msra.mxu0 0.0
        %815 = vmatprep.subr.mxu0 0.0
        %816 = vmatpush2.msra.mxu0 0.0
        %817 = vmatprep.subr.mxu0 0.0
        %818 = vmatpush2.msra.mxu0 0.0
        %819 = vmatprep.subr.mxu0 0.0
        %820 = vmatpush2.msra.mxu0 0.0
        %821 = vmatprep.subr.mxu0 0.0
        %822 = vmatpush2.msra.mxu0 0.0
        %823 = vmatprep.subr.mxu0 0.0
        %824 = vmatpush2.msra.mxu0 0.0
        %825 = vmatprep.subr.mxu0 0.0
        %826 = vmatpush2.msra.mxu0 0.0
        %827 = vmatprep.subr.mxu0 0.0
        %828 = vmatpush2.msra.mxu0 0.0
        %829 = vmatprep.subr.mxu0 0.0
        %830 = vmatpush2.msra.mxu0 0.0
        %831 = vmatprep.subr.mxu0 0.0
        %832 = vmatpush2.msra.mxu0 0.0
        %833 = vmatprep.subr.mxu0 0.0
        %834 = vmatpush2.msra.mxu0 0.0
        %835 = vmatprep.subr.mxu0 0.0
        %836 = vmatpush2.msra.mxu0 0.0
        %837 = vmatprep.subr.mxu0 0.0
        %838 = vmatpush2.msra.mxu0 0.0
        %839 = vmatprep.mubr.f32.mxu0 0.0
        %840 = vmatmul.mubr.f32.gmra.mxu0 %v764
        %v841 = vpop.f32.mrf.mxu0
        %v842 = vadd.f32 %v745, %v841
        %v843 = vpop.f32.mrf.mxu0
        %844 = vmatprep.mubr.f32.mxu0 0.0
        %845 = vmatmul.mubr.f32.gmra.mxu0 %v767
        %v846 = vpop.f32.mrf.mxu0
        %v847 = vadd.f32 %v750, %v846
        %v848 = vpop.f32.mrf.mxu0
        %849 = vmatprep.mubr.f32.mxu0 0.0
        %850 = vmatmul.mubr.f32.gmra.mxu0 %v770
        %v851 = vpop.f32.mrf.mxu0
        %v852 = vadd.f32 %v755, %v851
        %v853 = vpop.f32.mrf.mxu0
        %854 = vmatprep.mubr.f32.mxu0 0.0
        %855 = vmatmul.mubr.f32.gmra.mxu0 %v773
        %v856 = vpop.f32.mrf.mxu0
        %v857 = vadd.f32 %v760, %v856
        %v858 = vpop.f32.mrf.mxu0
        %859 = vdwg.mxu0
        %v860 = vmax.f32 %v842, 0.0
        %v861 = vmax.f32 %v847, 0.0
        %v862 = vmax.f32 %v852, 0.0
        %v863 = vmax.f32 %v857, 0.0
        %v864 = vld [vmem:[%s368] sm:$0xff]
        %v865 = vld [vmem:[%s368 + $0x8] sm:$0xff]
        %v866 = vld [vmem:[%s368 + $0x10] sm:$0xff]
        %v867 = vld [vmem:[%s368 + $0x18] sm:$0xff]
        %vm868 = vcmp.lt.f32.partialorder %v864, 0.9
        %vm869 = vcmp.lt.f32.partialorder %v865, 0.9
        %vm870 = vcmp.lt.f32.partialorder %v866, 0.9
        %vm871 = vcmp.lt.f32.partialorder %v867, 0.9
        %v872 = vmul.f32 %v860, 1.1111112
        %v873 = vmul.f32 %v861, 1.1111112
        %v874 = vmul.f32 %v862, 1.1111112
        %v875 = vmul.f32 %v863, 1.1111112
        %v876 = vsel %vm868, %v872, 0.0
        %v877 = vsel %vm869, %v873, 0.0
        %v878 = vsel %vm870, %v874, 0.0
        %v879 = vsel %vm871, %v875, 0.0
        %880 = vst [vmem:[%s411] sm:$0xff] %v876
        %881 = vst [vmem:[%s411 + $0x8] sm:$0xff] %v877
        %882 = vst [vmem:[%s411 + $0x10] sm:$0xff] %v878
        %883 = vst [vmem:[%s411 + $0x18] sm:$0xff] %v879
        %s884 = sand.u32 %s184, 1
        %s885 = scalar_lea.sflag [#allocation4], %s884
        %s886 = sand.u32 %s184, 1
        %s887 = smul.addr %s886, 32
        %s888 = scalar_lea.vmem [#allocation13], %s887
        // Predicated region
        $region69: #{tpu_custom_call.1} parent=43 // pred_check
          %p889 = pneg %p194
        $region70: #{tpu_custom_call.1} parent=43 // pred_check_branch
          %891 = sbr.rel (%p889) target = $region72
        $region71: #{tpu_custom_call.1} parent=43 // pred_region
          %s893 = ssub.s32 512, 512
          %894 = vsyncadd %s885, %s893
          %s895 = smul.addr %s30, 128
          %s896 = scalar_lea.hbm %s6, %s895
          %s897 = sshll.u32 %s888, 4
          %s898 = int_to_ptr.vmem [resolvable:$true] %s897
          %903 = dma.vmem_to_hbm [thread:$0]  %s898, 512, %s896, %s885, 128, 256, 8
        $region72: #{tpu_custom_call.1} parent=43 // pred_fallthru
          _
      $region44: #{tpu_custom_call.1} parent=5 // pred_fallthru
        _
      %p904 = scmp.le.s32.totalorder 2, %s25
      // Predicated region
      $region73: #{tpu_custom_call.1} parent=5 // pred_check
        %p905 = pneg %p904
      $region74: #{tpu_custom_call.1} parent=5 // pred_check_branch
        %907 = sbr.rel (%p905) target = $region76
      $region75: #{tpu_custom_call.1} parent=5 // pred_region
        %s908 = ssub.s32 %s25, 2
        // Predicated region
        $region77: #{tpu_custom_call.1} parent=75 // pred_check
          %p909 = pneg %p200
        $region78: #{tpu_custom_call.1} parent=75 // pred_check_branch
          %911 = sbr.rel (%p909) target = $region80
        $region79: #{tpu_custom_call.1} parent=75 // pred_region
          %s912 = sand.u32 %s185, 1
          %s913 = scalar_lea.sflag [#allocation4], %s912
          %s914 = sand.u32 %s185, 1
          %s915 = smul.addr %s914, 32
          %s916 = scalar_lea.vmem [#allocation13], %s915
          %917 = dma.done %s913, 512
        $region80: #{tpu_custom_call.1} parent=75 // pred_fallthru
          _
      $region76: #{tpu_custom_call.1} parent=5 // pred_fallthru
        _
    $region6: #{tpu_custom_call.1} parent=1 // loop_footer
      %s29 = sadd.s32 1, %s25
    $region7: #{tpu_custom_call.1} parent=1 // loop_footer_branch
      %24 = sbr.rel target = $region3
    $region8: #{tpu_custom_call.1} parent=1 // loop_exit
      _
    %918 = vsyncpa [#allocation3], 1
    %s919 = scalar_lea.sflag [#allocation3], 1
    %920 = vsyncpa %s919, 1
    %921 = vsyncpa [#allocation6], 1
    %s922 = scalar_lea.sflag [#allocation6], 1
    %923 = vsyncpa %s922, 1
    %924 = vsyncpa [#allocation9], 1
    %925 = vsyncpa [#allocation12], 1
    %s926 = scalar_lea.sflag [#allocation12], 1
    %927 = vsyncpa %s926, 1
    %928 = vsyncpa [#allocation4], 1
    %s929 = scalar_lea.sflag [#allocation4], 1
    %930 = vsyncpa %s929, 1

</llo_original>
